<compile_context>
chip_gen: v5e
topology: v5e:2x2
jax: 0.10.0
libtpu: 0.0.40
codegen_flags: <defaults>
</compile_context>

<pallas_src>
import math

import jax
import jax.numpy as jnp
from jax.experimental import pallas as pl
from jax.experimental.pallas import tpu as pltpu


def _make_kernel(K, F, O, tile_n, n_nodes):
    """Fused PNA-LSPE tower + mixing kernel for one node tile."""
    F2, O2 = 2 * F, 2 * O

    def kernel(src_oh_ref, hp_full_ref, hp_tile_ref, snorm_ref,
               w_src_ref, w_dst_ref, b_dst_ref,
               w_post_ref, b_post_ref, w_mix_ref, b_mix_ref,
               out_ref):
        dot = lambda a, b: jnp.dot(a, b, preferred_element_type=jnp.float32)

        # 1) pretrans Linear applied BEFORE the gather (dot(oh, x) @ W == dot(oh, x @ W)).
        #    proj[:, :F] = source part of pretrans_h, proj[:, F:] = source part of pretrans_p.
        proj = dot(hp_full_ref[...], w_src_ref[...]).astype(jnp.bfloat16)     # (N, 2F)

        # 2) destination-node contribution + biases (identical for all K in-edges of a node).
        dst = dot(hp_tile_ref[...], w_dst_ref[...]) + b_dst_ref[...]          # (tile_n, 2F)

        # 3) ONE fused gather matmul for all K neighbours of the whole node tile (bf16 MXU).
        oh_flat = src_oh_ref[...].reshape(K * tile_n, n_nodes)                # bf16
        gath = dot(oh_flat, proj).reshape(K, tile_n, F2)                      # f32
        e = gath + dst[None, :, :]                                            # pretrans edge feats

        # 4) mean / max / min over the K in-neighbours; k=0 peeled (no zeros/±inf init).
        acc_sum = e[0]
        acc_max = e[0]
        acc_min = e[0]
        for k in range(1, K):
            ek = e[k]
            acc_sum = acc_sum + ek
            acc_max = jnp.maximum(acc_max, ek)
            acc_min = jnp.minimum(acc_min, ek)
        mean_e = acc_sum * (1.0 / K)

        # 5) posttrans_h + posttrans_p as ONE matmul (scalers folded into w_post).
        x = jnp.concatenate([hp_tile_ref[...], mean_e, acc_max, acc_min], axis=-1)  # (tile_n, 8F)
        post = dot(x, w_post_ref[...]) + b_post_ref[...]                      # (tile_n, 2O)

        # 6) graph norm on the h half only, fused block-diagonal mixing, per-half activation.
        is_h = jax.lax.broadcasted_iota(jnp.int32, (tile_n, O2), 1) < O
        post = post * jnp.where(is_h, snorm_ref[...], 1.0)
        mix = dot(post, w_mix_ref[...]) + b_mix_ref[...]                      # (tile_n, 2O)
        out_ref[...] = jnp.where(is_h,
                                 jnp.where(mix >= 0.0, mix, 0.01 * mix),      # LeakyReLU(0.01)
                                 jnp.tanh(mix))                               # tanh

    return kernel


def pna_lspe_forward(params, src_idx, h, p, snorm_n, avg_d_log, tile_n=None):
    """Wrapper: builds the bf16 one-hot gather tensor, folds weights, calls the kernel."""
    N, F = h.shape
    K = src_idx.shape[1]
    O = params["w_mix_h"].shape[1]
    amp = math.log(K + 1.0) / avg_d_log
    att = avg_d_log / math.log(K + 1.0)

    # Node-tile size: biggest standard tile dividing N (falls back to the full array).
    if tile_n is None:
        tile_n = N
        for cand in (512, 256, 128):
            if N % cand == 0:
                tile_n = cand
                break
    assert N % tile_n == 0 and (tile_n == N or tile_n % 8 == 0)

    # One-hot gather tensor, bf16 (0/1 are exact): src_oh[k, i, :] selects the k-th
    # in-neighbour of node i.  NOTE: out-of-range indices silently gather zeros.
    src_oh = jnp.transpose(jax.nn.one_hot(src_idx, N, dtype=jnp.bfloat16), (1, 0, 2))
    hp = jnp.concatenate([h, p], axis=-1).astype(jnp.float32)                 # (N, 2F)

    # ----------------- host-side weight folding (negligible cost) -----------------
    wph, bph = params["w_pre_h"], params["b_pre_h"]        # (4F, F), (1, F)
    wpp, bpp = params["w_pre_p"], params["b_pre_p"]        # (2F, F), (1, F)
    zF = jnp.zeros((F, F), jnp.float32)
    # [h|p] @ w_src == [pretrans_h(src part) | pretrans_p(src part)]
    w_src = jnp.concatenate([
        jnp.concatenate([wph[0:F], zF], axis=-1),
        jnp.concatenate([wph[F:2 * F], wpp[0:F]], axis=-1)], axis=0)          # (2F, 2F)
    # [h|p] @ w_dst + b_dst == [pretrans_h(dst part) | pretrans_p(dst part)]
    w_dst = jnp.concatenate([
        jnp.concatenate([wph[2 * F:3 * F], zF], axis=-1),
        jnp.concatenate([wph[3 * F:4 * F], wpp[F:2 * F]], axis=-1)], axis=0)  # (2F, 2F)
    b_dst = jnp.concatenate([bph, bpp], axis=-1)                              # (1, 2F)

    wh, bh = params["w_post_h"], params["b_post_h"]        # (11F, O), (1, O)
    wp, bp = params["w_post_p"], params["b_post_p"]        # (10F, O), (1, O)
    # Fold identity / amplification / attenuation scalers into the posttrans weights.
    mean_h = wh[2 * F:3 * F] + amp * wh[5 * F:6 * F] + att * wh[8 * F:9 * F]
    max_h = wh[3 * F:4 * F] + amp * wh[6 * F:7 * F] + att * wh[9 * F:10 * F]
    min_h = wh[4 * F:5 * F] + amp * wh[7 * F:8 * F] + att * wh[10 * F:11 * F]
    mean_p = wp[F:2 * F] + amp * wp[4 * F:5 * F] + att * wp[7 * F:8 * F]
    max_p = wp[2 * F:3 * F] + amp * wp[5 * F:6 * F] + att * wp[8 * F:9 * F]
    min_p = wp[3 * F:4 * F] + amp * wp[6 * F:7 * F] + att * wp[9 * F:10 * F]
    zO = jnp.zeros((F, O), jnp.float32)
    # rows: [h | p | mean_h | mean_p | max_h | max_p | min_h | min_p] -> cols [h_post | p_post]
    w_post = jnp.concatenate([
        jnp.concatenate([wh[0:F], zO], axis=-1),
        jnp.concatenate([wh[F:2 * F], wp[0:F]], axis=-1),
        jnp.concatenate([mean_h, zO], axis=-1),
        jnp.concatenate([zO, mean_p], axis=-1),
        jnp.concatenate([max_h, zO], axis=-1),
        jnp.concatenate([zO, max_p], axis=-1),
        jnp.concatenate([min_h, zO], axis=-1),
        jnp.concatenate([zO, min_p], axis=-1)], axis=0)                       # (8F, 2O)
    b_post = jnp.concatenate([bh, bp], axis=-1)                               # (1, 2O)

    zOO = jnp.zeros((O, O), jnp.float32)
    w_mix = jnp.concatenate([
        jnp.concatenate([params["w_mix_h"], zOO], axis=-1),
        jnp.concatenate([zOO, params["w_mix_p"]], axis=-1)], axis=0)          # (2O, 2O)
    b_mix = jnp.concatenate([params["b_mix_h"], params["b_mix_p"]], axis=-1)  # (1, 2O)

    kernel = _make_kernel(K, F, O, tile_n, N)
    full2d = lambda shape: pl.BlockSpec(shape, lambda i: (0, 0))

    out = pl.pallas_call(
        kernel,
        grid=(N // tile_n,),
        in_specs=[
            pl.BlockSpec((K, tile_n, N), lambda i: (0, i, 0)),    # src_oh node tile (bf16)
            full2d((N, 2 * F)),                                   # hp (all source nodes)
            pl.BlockSpec((tile_n, 2 * F), lambda i: (i, 0)),      # hp (destination tile)
            pl.BlockSpec((tile_n, 1), lambda i: (i, 0)),          # snorm tile
            full2d((2 * F, 2 * F)),                               # w_src
            full2d((2 * F, 2 * F)),                               # w_dst
            full2d((1, 2 * F)),                                   # b_dst
            full2d((8 * F, 2 * O)),                               # w_post (scalers folded)
            full2d((1, 2 * O)),                                   # b_post
            full2d((2 * O, 2 * O)),                               # w_mix (block-diagonal)
            full2d((1, 2 * O)),                                   # b_mix
        ],
        out_specs=pl.BlockSpec((tile_n, 2 * O), lambda i: (i, 0)),
        out_shape=jax.ShapeDtypeStruct((N, 2 * O), jnp.float32),
        compiler_params=pltpu.CompilerParams(
            dimension_semantics=("parallel",),        # node tiles shard across TCs (v7x)
            vmem_limit_bytes=56 * 1024 * 1024),       # safe on v5e/v6e/v7x
    )(src_oh, hp, hp, snorm_n.astype(jnp.float32),
      w_src, w_dst, b_dst, w_post, b_post, w_mix, b_mix)

    return out[:, :O], out[:, O:]


def init_params(key, F, O):
    """Deterministic PyTorch-Linear-style init. Weights are stored (in, out)."""
    def linear(k, fan_in, fan_out):
        kw, kb = jax.random.split(k)
        bound = 1.0 / math.sqrt(fan_in)
        w = jax.random.uniform(kw, (fan_in, fan_out), jnp.float32, -bound, bound)
        b = jax.random.uniform(kb, (1, fan_out), jnp.float32, -bound, bound)
        return w, b

    keys = jax.random.split(key, 6)
    prm = {}
    prm["w_pre_h"], prm["b_pre_h"] = linear(keys[0], 4 * F, F)     # pretrans_h (MLP, layers=1)
    prm["w_pre_p"], prm["b_pre_p"] = linear(keys[1], 2 * F, F)     # pretrans_p
    prm["w_post_h"], prm["b_post_h"] = linear(keys[2], 11 * F, O)  # (3*3 + 2) * F
    prm["w_post_p"], prm["b_post_p"] = linear(keys[3], 10 * F, O)  # (3*3 + 1) * F
    prm["w_mix_h"], prm["b_mix_h"] = linear(keys[4], O, O)         # mixing_network_h
    prm["w_mix_p"], prm["b_mix_p"] = linear(keys[5], O, O)         # mixing_network_p
    return prm


def reference_forward(params, src_idx, h, p, snorm_n, avg_d_log):
    """Pure-JAX reference mirroring the PyTorch module structure (for validation)."""
    N, F = h.shape
    K = src_idx.shape[1]
    h_t = jnp.concatenate([h, p], axis=-1)                 # tower 'h' input (divide_input, 1 tower)
    src_h_t = h_t[src_idx]                                 # (N, K, 2F)
    src_p = p[src_idx]                                     # (N, K, F)
    dst_h_t = jnp.broadcast_to(h_t[:, None, :], (N, K, 2 * F))
    dst_p = jnp.broadcast_to(p[:, None, :], (N, K, F))
    z_h = jnp.concatenate([src_h_t, dst_h_t], axis=-1)
    z_p = jnp.concatenate([src_p, dst_p], axis=-1)
    e_h = z_h @ params["w_pre_h"] + params["b_pre_h"]
    e_p = z_p @ params["w_pre_p"] + params["b_pre_p"]

    def agg_scale(e):
        a = jnp.concatenate([e.mean(axis=1), e.max(axis=1), e.min(axis=1)], axis=-1)
        amp = a * (math.log(K + 1.0) / avg_d_log)
        att = a * (avg_d_log / math.log(K + 1.0))
        return jnp.concatenate([a, amp, att], axis=-1)

    agg_h = agg_scale(e_h)
    agg_p = agg_scale(e_p)
    h_post = jnp.concatenate([h_t, agg_h], axis=-1) @ params["w_post_h"] + params["b_post_h"]
    p_post = jnp.concatenate([p, agg_p], axis=-1) @ params["w_post_p"] + params["b_post_p"]
    h_post = h_post * snorm_n
    h_mix = h_post @ params["w_mix_h"] + params["b_mix_h"]
    p_mix = p_post @ params["w_mix_p"] + params["b_mix_p"]
    return jnp.where(h_mix >= 0, h_mix, 0.01 * h_mix), jnp.tanh(p_mix)


if __name__ == "__main__":
    N, K, F, O = 32, 8, 16, 16          # nodes, fixed in-degree, in_dim, out_dim
    avg_d_log = math.log(5.0)

    key = jax.random.PRNGKey(0)
    k1, k2, k3, k4, k5 = jax.random.split(key, 5)
    h = jax.random.normal(k1, (N, F), jnp.float32)
    p = jax.random.normal(k2, (N, F), jnp.float32)
    snorm_n = jax.random.uniform(k3, (N, 1), jnp.float32, 0.2, 1.0)
    src_idx = jax.random.randint(k4, (N, K), 0, N)          # k-th in-neighbour of each node
    params = init_params(k5, F, O)

    # explicit index-range check (one-hot silently yields zero rows for bad indices)
    assert int(src_idx.min()) >= 0 and int(src_idx.max()) < N

    h_out, p_out = pna_lspe_forward(params, src_idx, h, p, snorm_n, avg_d_log)
    jax.block_until_ready((h_out, p_out))

    h_ref, p_ref = reference_forward(params, src_idx, h, p, snorm_n, avg_d_log)
    assert h_out.shape == (N, O) and p_out.shape == (N, O)
    # tolerance relaxed vs. pure-f32: gathered pretrans projections are rounded to bf16
    assert jnp.allclose(h_out, h_ref, atol=2e-2, rtol=2e-2)
    assert jnp.allclose(p_out, p_ref, atol=2e-2, rtol=2e-2)
    print("KERNEL_OK")
</pallas_src>

<mosaic_0001>
module attributes {stable_mosaic.version = 11 : i64} {
  func.func @kernel(%arg0: i32, %arg1: memref<8x32x32xbf16, #tpu.memory_space<vmem>>, %arg2: memref<32x32xf32, #tpu.memory_space<vmem>>, %arg3: memref<32x32xf32, #tpu.memory_space<vmem>>, %arg4: memref<32x1xf32, #tpu.memory_space<vmem>>, %arg5: memref<32x32xf32, #tpu.memory_space<vmem>>, %arg6: memref<32x32xf32, #tpu.memory_space<vmem>>, %arg7: memref<1x32xf32, #tpu.memory_space<vmem>>, %arg8: memref<128x32xf32, #tpu.memory_space<vmem>>, %arg9: memref<1x32xf32, #tpu.memory_space<vmem>>, %arg10: memref<32x32xf32, #tpu.memory_space<vmem>>, %arg11: memref<1x32xf32, #tpu.memory_space<vmem>>, %arg12: memref<32x32xf32, #tpu.memory_space<vmem>>) attributes {dimension_semantics = [#tpu.dimension_semantics<parallel>], iteration_bounds = array<i64: 1>, scalar_prefetch = 0 : i64, scratch_operands = 0 : i64, tpu.core_type = #tpu.core_type<tc>, window_params = [{transform_indices = @transform_0, window_bounds = array<i64: 8, 32, 32>}, {pipeline_mode = #tpu.pipeline_mode<synchronous>, transform_indices = @transform_1, window_bounds = array<i64: 32, 32>}, {transform_indices = @transform_2, window_bounds = array<i64: 32, 32>}, {transform_indices = @transform_3, window_bounds = array<i64: 32, 1>}, {pipeline_mode = #tpu.pipeline_mode<synchronous>, transform_indices = @transform_4, window_bounds = array<i64: 32, 32>}, {pipeline_mode = #tpu.pipeline_mode<synchronous>, transform_indices = @transform_5, window_bounds = array<i64: 32, 32>}, {pipeline_mode = #tpu.pipeline_mode<synchronous>, transform_indices = @transform_6, window_bounds = array<i64: 1, 32>}, {pipeline_mode = #tpu.pipeline_mode<synchronous>, transform_indices = @transform_7, window_bounds = array<i64: 128, 32>}, {pipeline_mode = #tpu.pipeline_mode<synchronous>, transform_indices = @transform_8, window_bounds = array<i64: 1, 32>}, {pipeline_mode = #tpu.pipeline_mode<synchronous>, transform_indices = @transform_9, window_bounds = array<i64: 32, 32>}, {pipeline_mode = #tpu.pipeline_mode<synchronous>, transform_indices = @transform_10, window_bounds = array<i64: 1, 32>}, {transform_indices = @transform_11, window_bounds = array<i64: 32, 32>}]} {
    %c0 = arith.constant 0 : index
    %c0_0 = arith.constant 0 : index
    %0 = vector.load %arg2[%c0, %c0_0] : memref<32x32xf32, #tpu.memory_space<vmem>>, vector<32x32xf32>
    %c0_1 = arith.constant 0 : index
    %c0_2 = arith.constant 0 : index
    %1 = vector.load %arg5[%c0_1, %c0_2] : memref<32x32xf32, #tpu.memory_space<vmem>>, vector<32x32xf32>
    %cst = arith.constant dense<0.000000e+00> : vector<32x32xf32>
    %2 = tpu.matmul %0, %1, %cst {dimension_numbers = #tpu.dot_dimension_numbers<[1], [0], [0], [1], [0, 0, 1, 1], [], []>} : vector<32x32xf32>, vector<32x32xf32>, vector<32x32xf32> -> vector<32x32xf32>
    %3 = arith.truncf %2 : vector<32x32xf32> to vector<32x32xbf16>
    %c0_3 = arith.constant 0 : index
    %c0_4 = arith.constant 0 : index
    %4 = vector.load %arg3[%c0_3, %c0_4] : memref<32x32xf32, #tpu.memory_space<vmem>>, vector<32x32xf32>
    %c0_5 = arith.constant 0 : index
    %c0_6 = arith.constant 0 : index
    %5 = vector.load %arg6[%c0_5, %c0_6] : memref<32x32xf32, #tpu.memory_space<vmem>>, vector<32x32xf32>
    %cst_7 = arith.constant dense<0.000000e+00> : vector<32x32xf32>
    %6 = tpu.matmul %4, %5, %cst_7 {dimension_numbers = #tpu.dot_dimension_numbers<[1], [0], [0], [1], [0, 0, 1, 1], [], []>} : vector<32x32xf32>, vector<32x32xf32>, vector<32x32xf32> -> vector<32x32xf32>
    %c0_8 = arith.constant 0 : index
    %c0_9 = arith.constant 0 : index
    %7 = vector.load %arg7[%c0_8, %c0_9] : memref<1x32xf32, #tpu.memory_space<vmem>>, vector<1x32xf32>
    %8 = vector.broadcast %7 : vector<1x32xf32> to vector<32x32xf32>
    %9 = arith.addf %6, %8 : vector<32x32xf32>
    %c0_10 = arith.constant 0 : index
    %c0_11 = arith.constant 0 : index
    %c0_12 = arith.constant 0 : index
    %10 = vector.load %arg1[%c0_10, %c0_11, %c0_12] : memref<8x32x32xbf16, #tpu.memory_space<vmem>>, vector<8x32x32xbf16>
    %11 = vector.shape_cast %10 : vector<8x32x32xbf16> to vector<256x32xbf16>
    %cst_13 = arith.constant dense<0.000000e+00> : vector<256x32xf32>
    %12 = tpu.matmul %11, %3, %cst_13 {dimension_numbers = #tpu.dot_dimension_numbers<[1], [0], [0], [1], [0, 0, 1, 1], [], []>} : vector<256x32xbf16>, vector<32x32xbf16>, vector<256x32xf32> -> vector<256x32xf32>
    %13 = vector.shape_cast %12 : vector<256x32xf32> to vector<8x32x32xf32>
    %14 = vector.shape_cast %9 : vector<32x32xf32> to vector<1x32x32xf32>
    %15 = vector.broadcast %14 : vector<1x32x32xf32> to vector<8x32x32xf32>
    %16 = arith.addf %13, %15 : vector<8x32x32xf32>
    %17 = vector.extract_strided_slice %16 {offsets = [0, 0, 0], sizes = [1, 32, 32], strides = [1, 1, 1]} : vector<8x32x32xf32> to vector<1x32x32xf32>
    %18 = vector.shape_cast %17 : vector<1x32x32xf32> to vector<32x32xf32>
    %19 = vector.extract_strided_slice %16 {offsets = [0, 0, 0], sizes = [1, 32, 32], strides = [1, 1, 1]} : vector<8x32x32xf32> to vector<1x32x32xf32>
    %20 = vector.shape_cast %19 : vector<1x32x32xf32> to vector<32x32xf32>
    %21 = vector.extract_strided_slice %16 {offsets = [0, 0, 0], sizes = [1, 32, 32], strides = [1, 1, 1]} : vector<8x32x32xf32> to vector<1x32x32xf32>
    %22 = vector.shape_cast %21 : vector<1x32x32xf32> to vector<32x32xf32>
    %23 = vector.extract_strided_slice %16 {offsets = [1, 0, 0], sizes = [1, 32, 32], strides = [1, 1, 1]} : vector<8x32x32xf32> to vector<1x32x32xf32>
    %24 = vector.shape_cast %23 : vector<1x32x32xf32> to vector<32x32xf32>
    %25 = arith.addf %18, %24 : vector<32x32xf32>
    %26 = arith.maximumf %20, %24 : vector<32x32xf32>
    %27 = arith.minimumf %22, %24 : vector<32x32xf32>
    %28 = vector.extract_strided_slice %16 {offsets = [2, 0, 0], sizes = [1, 32, 32], strides = [1, 1, 1]} : vector<8x32x32xf32> to vector<1x32x32xf32>
    %29 = vector.shape_cast %28 : vector<1x32x32xf32> to vector<32x32xf32>
    %30 = arith.addf %25, %29 : vector<32x32xf32>
    %31 = arith.maximumf %26, %29 : vector<32x32xf32>
    %32 = arith.minimumf %27, %29 : vector<32x32xf32>
    %33 = vector.extract_strided_slice %16 {offsets = [3, 0, 0], sizes = [1, 32, 32], strides = [1, 1, 1]} : vector<8x32x32xf32> to vector<1x32x32xf32>
    %34 = vector.shape_cast %33 : vector<1x32x32xf32> to vector<32x32xf32>
    %35 = arith.addf %30, %34 : vector<32x32xf32>
    %36 = arith.maximumf %31, %34 : vector<32x32xf32>
    %37 = arith.minimumf %32, %34 : vector<32x32xf32>
    %38 = vector.extract_strided_slice %16 {offsets = [4, 0, 0], sizes = [1, 32, 32], strides = [1, 1, 1]} : vector<8x32x32xf32> to vector<1x32x32xf32>
    %39 = vector.shape_cast %38 : vector<1x32x32xf32> to vector<32x32xf32>
    %40 = arith.addf %35, %39 : vector<32x32xf32>
    %41 = arith.maximumf %36, %39 : vector<32x32xf32>
    %42 = arith.minimumf %37, %39 : vector<32x32xf32>
    %43 = vector.extract_strided_slice %16 {offsets = [5, 0, 0], sizes = [1, 32, 32], strides = [1, 1, 1]} : vector<8x32x32xf32> to vector<1x32x32xf32>
    %44 = vector.shape_cast %43 : vector<1x32x32xf32> to vector<32x32xf32>
    %45 = arith.addf %40, %44 : vector<32x32xf32>
    %46 = arith.maximumf %41, %44 : vector<32x32xf32>
    %47 = arith.minimumf %42, %44 : vector<32x32xf32>
    %48 = vector.extract_strided_slice %16 {offsets = [6, 0, 0], sizes = [1, 32, 32], strides = [1, 1, 1]} : vector<8x32x32xf32> to vector<1x32x32xf32>
    %49 = vector.shape_cast %48 : vector<1x32x32xf32> to vector<32x32xf32>
    %50 = arith.addf %45, %49 : vector<32x32xf32>
    %51 = arith.maximumf %46, %49 : vector<32x32xf32>
    %52 = arith.minimumf %47, %49 : vector<32x32xf32>
    %53 = vector.extract_strided_slice %16 {offsets = [7, 0, 0], sizes = [1, 32, 32], strides = [1, 1, 1]} : vector<8x32x32xf32> to vector<1x32x32xf32>
    %54 = vector.shape_cast %53 : vector<1x32x32xf32> to vector<32x32xf32>
    %55 = arith.addf %50, %54 : vector<32x32xf32>
    %56 = arith.maximumf %51, %54 : vector<32x32xf32>
    %57 = arith.minimumf %52, %54 : vector<32x32xf32>
    %cst_14 = arith.constant 1.250000e-01 : f32
    %58 = vector.broadcast %cst_14 : f32 to vector<32x32xf32>
    %59 = arith.mulf %55, %58 : vector<32x32xf32>
    %c0_15 = arith.constant 0 : index
    %c0_16 = arith.constant 0 : index
    %60 = vector.load %arg3[%c0_15, %c0_16] : memref<32x32xf32, #tpu.memory_space<vmem>>, vector<32x32xf32>
    %61 = tpu.concatenate %60, %59, %56, %57 in 1 : vector<32x32xf32>, vector<32x32xf32>, vector<32x32xf32>, vector<32x32xf32> -> vector<32x128xf32>
    %c0_17 = arith.constant 0 : index
    %c0_18 = arith.constant 0 : index
    %62 = vector.load %arg8[%c0_17, %c0_18] : memref<128x32xf32, #tpu.memory_space<vmem>>, vector<128x32xf32>
    %cst_19 = arith.constant dense<0.000000e+00> : vector<32x32xf32>
    %63 = tpu.matmul %61, %62, %cst_19 {dimension_numbers = #tpu.dot_dimension_numbers<[1], [0], [0], [1], [0, 0, 1, 1], [], []>} : vector<32x128xf32>, vector<128x32xf32>, vector<32x32xf32> -> vector<32x32xf32>
    %c0_20 = arith.constant 0 : index
    %c0_21 = arith.constant 0 : index
    %64 = vector.load %arg9[%c0_20, %c0_21] : memref<1x32xf32, #tpu.memory_space<vmem>>, vector<1x32xf32>
    %65 = vector.broadcast %64 : vector<1x32xf32> to vector<32x32xf32>
    %66 = arith.addf %63, %65 : vector<32x32xf32>
    %67 = tpu.iota {dimensions = array<i32: 1>} : vector<32x32xi32>
    %c16_i32 = arith.constant 16 : i32
    %68 = vector.broadcast %c16_i32 : i32 to vector<32x32xi32>
    %69 = arith.cmpi slt, %67, %68 : vector<32x32xi32>
    %c0_22 = arith.constant 0 : index
    %c0_23 = arith.constant 0 : index
    %70 = vector.load %arg4[%c0_22, %c0_23] : memref<32x1xf32, #tpu.memory_space<vmem>>, vector<32x1xf32>
    %cst_24 = arith.constant 1.000000e+00 : f32
    %71 = vector.shape_cast %70 : vector<32x1xf32> to vector<32x1xf32>
    %72 = vector.broadcast %71 : vector<32x1xf32> to vector<32x32xf32>
    %73 = vector.broadcast %cst_24 : f32 to vector<32x32xf32>
    %74 = arith.select %69, %72, %73 : vector<32x32xi1>, vector<32x32xf32>
    %75 = arith.mulf %66, %74 : vector<32x32xf32>
    %c0_25 = arith.constant 0 : index
    %c0_26 = arith.constant 0 : index
    %76 = vector.load %arg10[%c0_25, %c0_26] : memref<32x32xf32, #tpu.memory_space<vmem>>, vector<32x32xf32>
    %cst_27 = arith.constant dense<0.000000e+00> : vector<32x32xf32>
    %77 = tpu.matmul %75, %76, %cst_27 {dimension_numbers = #tpu.dot_dimension_numbers<[1], [0], [0], [1], [0, 0, 1, 1], [], []>} : vector<32x32xf32>, vector<32x32xf32>, vector<32x32xf32> -> vector<32x32xf32>
    %c0_28 = arith.constant 0 : index
    %c0_29 = arith.constant 0 : index
    %78 = vector.load %arg11[%c0_28, %c0_29] : memref<1x32xf32, #tpu.memory_space<vmem>>, vector<1x32xf32>
    %79 = vector.broadcast %78 : vector<1x32xf32> to vector<32x32xf32>
    %80 = arith.addf %77, %79 : vector<32x32xf32>
    %cst_30 = arith.constant 0.000000e+00 : f32
    %81 = vector.broadcast %cst_30 : f32 to vector<32x32xf32>
    %82 = arith.cmpf oge, %80, %81 : vector<32x32xf32>
    %cst_31 = arith.constant 0.00999999977 : f32
    %83 = vector.broadcast %cst_31 : f32 to vector<32x32xf32>
    %84 = arith.mulf %83, %80 : vector<32x32xf32>
    %85 = arith.select %82, %80, %84 : vector<32x32xi1>, vector<32x32xf32>
    %86 = math.tanh %80 : vector<32x32xf32>
    %87 = arith.select %69, %85, %86 : vector<32x32xi1>, vector<32x32xf32>
    %c0_32 = arith.constant 0 : index
    %c0_33 = arith.constant 0 : index
    %88 = vector.load %arg12[%c0_32, %c0_33] : memref<32x32xf32, #tpu.memory_space<vmem>>, vector<32x32xf32>
    tpu.vector_store %arg12[%c0_32, %c0_33], %87 {strides = array<i32>} : memref<32x32xf32, #tpu.memory_space<vmem>>, vector<32x32xf32>,
    return
  }
  func.func @transform_0(%arg0: i32) -> (i32, i32, i32) {
    %c0_i32 = arith.constant 0 : i32
    %c0_i32_0 = arith.constant 0 : i32
    %c0_i32_1 = arith.constant 0 : i32
    return %c0_i32, %arg0, %c0_i32_0 : i32, i32, i32
  }
  func.func @transform_1(%arg0: i32) -> (i32, i32) {
    %c0_i32 = arith.constant 0 : i32
    %c0_i32_0 = arith.constant 0 : i32
    %c0_i32_1 = arith.constant 0 : i32
    return %c0_i32, %c0_i32_0 : i32, i32
  }
  func.func @transform_2(%arg0: i32) -> (i32, i32) {
    %c0_i32 = arith.constant 0 : i32
    %c0_i32_0 = arith.constant 0 : i32
    return %arg0, %c0_i32 : i32, i32
  }
  func.func @transform_3(%arg0: i32) -> (i32, i32) {
    %c0_i32 = arith.constant 0 : i32
    %c0_i32_0 = arith.constant 0 : i32
    return %arg0, %c0_i32 : i32, i32
  }
  func.func @transform_4(%arg0: i32) -> (i32, i32) {
    %c0_i32 = arith.constant 0 : i32
    %c0_i32_0 = arith.constant 0 : i32
    %c0_i32_1 = arith.constant 0 : i32
    return %c0_i32, %c0_i32_0 : i32, i32
  }
  func.func @transform_5(%arg0: i32) -> (i32, i32) {
    %c0_i32 = arith.constant 0 : i32
    %c0_i32_0 = arith.constant 0 : i32
    %c0_i32_1 = arith.constant 0 : i32
    return %c0_i32, %c0_i32_0 : i32, i32
  }
  func.func @transform_6(%arg0: i32) -> (i32, i32) {
    %c0_i32 = arith.constant 0 : i32
    %c0_i32_0 = arith.constant 0 : i32
    %c0_i32_1 = arith.constant 0 : i32
    return %c0_i32, %c0_i32_0 : i32, i32
  }
  func.func @transform_7(%arg0: i32) -> (i32, i32) {
    %c0_i32 = arith.constant 0 : i32
    %c0_i32_0 = arith.constant 0 : i32
    %c0_i32_1 = arith.constant 0 : i32
    return %c0_i32, %c0_i32_0 : i32, i32
  }
  func.func @transform_8(%arg0: i32) -> (i32, i32) {
    %c0_i32 = arith.constant 0 : i32
    %c0_i32_0 = arith.constant 0 : i32
    %c0_i32_1 = arith.constant 0 : i32
    return %c0_i32, %c0_i32_0 : i32, i32
  }
  func.func @transform_9(%arg0: i32) -> (i32, i32) {
    %c0_i32 = arith.constant 0 : i32
    %c0_i32_0 = arith.constant 0 : i32
    %c0_i32_1 = arith.constant 0 : i32
    return %c0_i32, %c0_i32_0 : i32, i32
  }
  func.func @transform_10(%arg0: i32) -> (i32, i32) {
    %c0_i32 = arith.constant 0 : i32
    %c0_i32_0 = arith.constant 0 : i32
    %c0_i32_1 = arith.constant 0 : i32
    return %c0_i32, %c0_i32_0 : i32, i32
  }
  func.func @transform_11(%arg0: i32) -> (i32, i32) {
    %c0_i32 = arith.constant 0 : i32
    %c0_i32_0 = arith.constant 0 : i32
    return %arg0, %c0_i32 : i32, i32
  }
}

</mosaic_0001>

<llo_original>
// kernel: tpu_custom_call.1
$region0: #{tpu_custom_call.1}
  #allocation0 [shape = 'u32[]', space=smem, size = 0x4, offset = 0x4, fixed_abs, tag = 'smem constant byte address 0x4 - core index']
  #allocation1 [shape = 'u32[72,128]{1,0:T(1,128)}', space=vmem, size = 0x9000, scoped, tag = 'internal scratch']
  %s0 = inlined_call_operand.vmem [shape: bf16[8,32,32], index: 0, kind: input, shape index: {}]
  %s1 = inlined_call_operand.vmem [shape: f32[32,32], index: 1, kind: input, shape index: {}]
  %s2 = inlined_call_operand.hbm [shape: f32[32,32], index: 2, kind: input, shape index: {}]
  %s3 = inlined_call_operand.vmem [shape: f32[32,1], index: 3, kind: input, shape index: {}]
  %s4 = inlined_call_operand.hbm [shape: f32[32,32], index: 4, kind: input, shape index: {}]
  %s5 = inlined_call_operand.hbm [shape: f32[32,32], index: 5, kind: input, shape index: {}]
  %s6 = inlined_call_operand.vmem [shape: f32[1,32], index: 6, kind: input, shape index: {}]
  %s7 = inlined_call_operand.vmem [shape: f32[128,32], index: 7, kind: input, shape index: {}]
  %s8 = inlined_call_operand.vmem [shape: f32[1,32], index: 8, kind: input, shape index: {}]
  %s9 = inlined_call_operand.hbm [shape: f32[32,32], index: 9, kind: input, shape index: {}]
  %s10 = inlined_call_operand.vmem [shape: f32[1,32], index: 10, kind: input, shape index: {}]
  %s11 = inlined_call_operand.hbm [shape: f32[32,32], index: 11, kind: output, shape index: {}]
  %s12 = sld [smem:[#allocation0]]
  $region70: #{tpu_custom_call.1} parent=0
    _
  %s14 = ssub.s32 1, %s12
  %s15 = scalar_select 0, %s14, %s12
  $region1: #{tpu_custom_call.1} parent=0
    #allocation2 [shape = 'u8[16384]{0}', space=vmem, size = 0x4000, scoped, tag = 'input window, operand 2, single buffered']
    #allocation3 [shape = 's32[1]{0}', space=sflag, size = 0x4, scoped, tag = 'scoped memory for tpu_custom_call.1']
    #allocation4 [shape = 's32[1]{0}', space=sflag, size = 0x4, scoped, tag = 'scoped memory for tpu_custom_call.1']
    #allocation5 [shape = 'u8[16384]{0}', space=vmem, size = 0x4000, scoped, tag = 'input window, operand 4, single buffered']
    #allocation6 [shape = 's32[1]{0}', space=sflag, size = 0x4, scoped, tag = 'scoped memory for tpu_custom_call.1']
    #allocation7 [shape = 'u8[16384]{0}', space=vmem, size = 0x4000, scoped, tag = 'input window, operand 5, single buffered']
    #allocation8 [shape = 'u8[16384]{0}', space=vmem, size = 0x4000, scoped, tag = 'input window, operand 9, single buffered']
    #allocation9 [shape = 's32[1]{0}', space=sflag, size = 0x4, scoped, tag = 'scoped memory for tpu_custom_call.1']
    #allocation10 [shape = 'u8[16384]{0}', space=vmem, size = 0x4000, scoped, tag = 'output window, operand 0, single buffered']
    %16 = vsyncpa [#allocation3], 0
    %17 = vsyncpa [#allocation6], 0
    %18 = vsyncpa [#allocation9], 0
    %19 = vsyncpa [#allocation4], 0
    // Predicated region
    $region2: #{tpu_custom_call.1} parent=1 // pred_check
      _
    $region3: #{tpu_custom_call.1} parent=1 // pred_check_branch
      %21 = sbr.rel (0) target = $region5
    $region4: #{tpu_custom_call.1} parent=1 // pred_region
      _
    $region5: #{tpu_custom_call.1} parent=1 // pred_fallthru
      _
    // Predicated region
    $region6: #{tpu_custom_call.1} parent=1 // pred_check
      _
    $region7: #{tpu_custom_call.1} parent=1 // pred_check_branch
      %23 = sbr.rel (0) target = $region9
    $region8: #{tpu_custom_call.1} parent=1 // pred_region
      _
    $region9: #{tpu_custom_call.1} parent=1 // pred_fallthru
      _
    // Predicated region
    $region10: #{tpu_custom_call.1} parent=1 // pred_check
      _
    $region11: #{tpu_custom_call.1} parent=1 // pred_check_branch
      %25 = sbr.rel (0) target = $region13
    $region12: #{tpu_custom_call.1} parent=1 // pred_region
      %27 = vsyncadd [#allocation3], 0
      %s28 = sshll.u32 %s2, 4
      %s29 = int_to_ptr.hbm [resolvable:$true] %s28
      %s30 = sshll.u32 [#allocation2], 4
      %s31 = int_to_ptr.vmem [resolvable:$true] %s30
      %36 = dma.hbm_to_vmem [thread:$0]  %s29, 512, %s31, [#allocation3], 128, 128, 8
    $region13: #{tpu_custom_call.1} parent=1 // pred_fallthru
      _
    // Predicated region
    $region14: #{tpu_custom_call.1} parent=1 // pred_check
      _
    $region15: #{tpu_custom_call.1} parent=1 // pred_check_branch
      %38 = sbr.rel (0) target = $region17
    $region16: #{tpu_custom_call.1} parent=1 // pred_region
      _
    $region17: #{tpu_custom_call.1} parent=1 // pred_fallthru
      _
    // Predicated region
    $region18: #{tpu_custom_call.1} parent=1 // pred_check
      _
    $region19: #{tpu_custom_call.1} parent=1 // pred_check_branch
      %40 = sbr.rel (0) target = $region21
    $region20: #{tpu_custom_call.1} parent=1 // pred_region
      %42 = vsyncadd [#allocation6], 0
      %s43 = sshll.u32 %s4, 4
      %s44 = int_to_ptr.hbm [resolvable:$true] %s43
      %s45 = sshll.u32 [#allocation5], 4
      %s46 = int_to_ptr.vmem [resolvable:$true] %s45
      %51 = dma.hbm_to_vmem [thread:$0]  %s44, 512, %s46, [#allocation6], 128, 128, 8
    $region21: #{tpu_custom_call.1} parent=1 // pred_fallthru
      _
    // Predicated region
    $region22: #{tpu_custom_call.1} parent=1 // pred_check
      _
    $region23: #{tpu_custom_call.1} parent=1 // pred_check_branch
      %53 = sbr.rel (0) target = $region25
    $region24: #{tpu_custom_call.1} parent=1 // pred_region
      %55 = vsyncadd [#allocation6], 0
      %s56 = sshll.u32 %s5, 4
      %s57 = int_to_ptr.hbm [resolvable:$true] %s56
      %s58 = sshll.u32 [#allocation7], 4
      %s59 = int_to_ptr.vmem [resolvable:$true] %s58
      %64 = dma.hbm_to_vmem [thread:$0]  %s57, 512, %s59, [#allocation6], 128, 128, 8
    $region25: #{tpu_custom_call.1} parent=1 // pred_fallthru
      _
    // Predicated region
    $region26: #{tpu_custom_call.1} parent=1 // pred_check
      _
    $region27: #{tpu_custom_call.1} parent=1 // pred_check_branch
      %66 = sbr.rel (0) target = $region29
    $region28: #{tpu_custom_call.1} parent=1 // pred_region
      _
    $region29: #{tpu_custom_call.1} parent=1 // pred_fallthru
      _
    // Predicated region
    $region30: #{tpu_custom_call.1} parent=1 // pred_check
      _
    $region31: #{tpu_custom_call.1} parent=1 // pred_check_branch
      %68 = sbr.rel (0) target = $region33
    $region32: #{tpu_custom_call.1} parent=1 // pred_region
      _
    $region33: #{tpu_custom_call.1} parent=1 // pred_fallthru
      _
    // Predicated region
    $region34: #{tpu_custom_call.1} parent=1 // pred_check
      _
    $region35: #{tpu_custom_call.1} parent=1 // pred_check_branch
      %70 = sbr.rel (0) target = $region37
    $region36: #{tpu_custom_call.1} parent=1 // pred_region
      _
    $region37: #{tpu_custom_call.1} parent=1 // pred_fallthru
      _
    // Predicated region
    $region38: #{tpu_custom_call.1} parent=1 // pred_check
      _
    $region39: #{tpu_custom_call.1} parent=1 // pred_check_branch
      %72 = sbr.rel (0) target = $region41
    $region40: #{tpu_custom_call.1} parent=1 // pred_region
      %74 = vsyncadd [#allocation9], 0
      %s75 = sshll.u32 %s9, 4
      %s76 = int_to_ptr.hbm [resolvable:$true] %s75
      %s77 = sshll.u32 [#allocation8], 4
      %s78 = int_to_ptr.vmem [resolvable:$true] %s77
      %83 = dma.hbm_to_vmem [thread:$0]  %s76, 512, %s78, [#allocation9], 128, 128, 8
    $region41: #{tpu_custom_call.1} parent=1 // pred_fallthru
      _
    // Predicated region
    $region42: #{tpu_custom_call.1} parent=1 // pred_check
      _
    $region43: #{tpu_custom_call.1} parent=1 // pred_check_branch
      %85 = sbr.rel (0) target = $region45
    $region44: #{tpu_custom_call.1} parent=1 // pred_region
      _
    $region45: #{tpu_custom_call.1} parent=1 // pred_fallthru
      _
    // Predicated region
    $region46: #{tpu_custom_call.1} parent=1 // pred_check
      _
    $region47: #{tpu_custom_call.1} parent=1 // pred_check_branch
      %87 = sbr.rel (0) target = $region49
    $region48: #{tpu_custom_call.1} parent=1 // pred_region
      %89 = dma.done [#allocation3], 512
    $region49: #{tpu_custom_call.1} parent=1 // pred_fallthru
      _
    // Predicated region
    $region50: #{tpu_custom_call.1} parent=1 // pred_check
      _
    $region51: #{tpu_custom_call.1} parent=1 // pred_check_branch
      %91 = sbr.rel (0) target = $region53
    $region52: #{tpu_custom_call.1} parent=1 // pred_region
      %93 = dma.done [#allocation6], 512
    $region53: #{tpu_custom_call.1} parent=1 // pred_fallthru
      _
    // Predicated region
    $region54: #{tpu_custom_call.1} parent=1 // pred_check
      _
    $region55: #{tpu_custom_call.1} parent=1 // pred_check_branch
      %95 = sbr.rel (0) target = $region57
    $region56: #{tpu_custom_call.1} parent=1 // pred_region
      %97 = dma.done [#allocation6], 512
    $region57: #{tpu_custom_call.1} parent=1 // pred_fallthru
      _
    // Predicated region
    $region58: #{tpu_custom_call.1} parent=1 // pred_check
      _
    $region59: #{tpu_custom_call.1} parent=1 // pred_check_branch
      %99 = sbr.rel (0) target = $region61
    $region60: #{tpu_custom_call.1} parent=1 // pred_region
      %101 = dma.done [#allocation9], 512
    $region61: #{tpu_custom_call.1} parent=1 // pred_fallthru
      _
    %v103 = vld [vmem:[%s1] sm:$0xff]
    %v104 = vld [vmem:[%s1 + $0x8] sm:$0xff]
    %v105 = vld [vmem:[%s1 + $0x10] sm:$0xff]
    %v106 = vld [vmem:[%s1 + $0x18] sm:$0xff]
    %v107 = vld [vmem:[#allocation5] sm:$0xff]
    %v108 = vld [vmem:[#allocation5 + $0x8] sm:$0xff]
    %v109 = vld [vmem:[#allocation5 + $0x10] sm:$0xff]
    %v110 = vld [vmem:[#allocation5 + $0x18] sm:$0xff]
    %vm111 = vcmask 261120
    %v113 = vsel %vm111, %v103, 0
    %v116 = vsel %vm111, %v104, 0
    %v119 = vsel %vm111, %v105, 0
    %v122 = vsel %vm111, %v106, 0
    %124 = vmatpush.msra.mxu0 0.0
    %125 = vmatpush.msra.mxu0 0.0
    %126 = vmatpush.msra.mxu0 0.0
    %127 = vmatpush.msra.mxu0 0.0
    %128 = vmatpush.msra.mxu0 0.0
    %129 = vmatpush.msra.mxu0 0.0
    %130 = vmatpush.msra.mxu0 0.0
    %131 = vmatpush.msra.mxu0 0.0
    %132 = vmatpush.msra.mxu0 0.0
    %133 = vmatpush.msra.mxu0 0.0
    %134 = vmatpush.msra.mxu0 0.0
    %135 = vmatpush.msra.mxu0 0.0
    %136 = vmatpush.msra.mxu0 %v110
    %137 = vmatpush.msra.mxu0 %v109
    %138 = vmatpush.msra.mxu0 %v108
    %139 = vmatpush.msra.mxu0 %v107
    %140 = vmatmul.f32.gmra.mxu0 %v113
    %v141 = vpop.f32.mrf.mxu0
    %v142 = vadd.f32 0.0, %v141
    %143 = vmatmul.f32.gmra.mxu0 %v116
    %v144 = vpop.f32.mrf.mxu0
    %v145 = vadd.f32 0.0, %v144
    %146 = vmatmul.f32.gmra.mxu0 %v119
    %v147 = vpop.f32.mrf.mxu0
    %v148 = vadd.f32 0.0, %v147
    %149 = vmatmul.f32.gmra.mxu0 %v122
    %v150 = vpop.f32.mrf.mxu0
    %v151 = vadd.f32 0.0, %v150
    %152 = vdwg.mxu0
    %v153 = vpack.c.bf16 %v145, %v142
    %v154 = vpack.c.bf16 %v151, %v148
    %v155 = vld [vmem:[#allocation2] sm:$0xff]
    %v156 = vld [vmem:[#allocation2 + $0x8] sm:$0xff]
    %v157 = vld [vmem:[#allocation2 + $0x10] sm:$0xff]
    %v158 = vld [vmem:[#allocation2 + $0x18] sm:$0xff]
    %v159 = vld [vmem:[#allocation7] sm:$0xff]
    %v160 = vld [vmem:[#allocation7 + $0x8] sm:$0xff]
    %v161 = vld [vmem:[#allocation7 + $0x10] sm:$0xff]
    %v162 = vld [vmem:[#allocation7 + $0x18] sm:$0xff]
    %v163 = vld [vmem:[%s6] sm:$0x1]
    %v165 = vperm.slane %v163, 0
    %v168 = vsel %vm111, %v155, 0
    %v171 = vsel %vm111, %v156, 0
    %v174 = vsel %vm111, %v157, 0
    %v177 = vsel %vm111, %v158, 0
    %179 = vmatpush.msra.mxu0 0.0
    %180 = vmatpush.msra.mxu0 0.0
    %181 = vmatpush.msra.mxu0 0.0
    %182 = vmatpush.msra.mxu0 0.0
    %183 = vmatpush.msra.mxu0 0.0
    %184 = vmatpush.msra.mxu0 0.0
    %185 = vmatpush.msra.mxu0 0.0
    %186 = vmatpush.msra.mxu0 0.0
    %187 = vmatpush.msra.mxu0 0.0
    %188 = vmatpush.msra.mxu0 0.0
    %189 = vmatpush.msra.mxu0 0.0
    %190 = vmatpush.msra.mxu0 0.0
    %191 = vmatpush.msra.mxu0 %v162
    %192 = vmatpush.msra.mxu0 %v161
    %193 = vmatpush.msra.mxu0 %v160
    %194 = vmatpush.msra.mxu0 %v159
    %195 = vmatmul.f32.gmra.mxu0 %v168
    %v196 = vpop.f32.mrf.mxu0
    %v197 = vadd.f32 %v165, %v196
    %198 = vmatmul.f32.gmra.mxu0 %v171
    %v199 = vpop.f32.mrf.mxu0
    %v200 = vadd.f32 %v165, %v199
    %201 = vmatmul.f32.gmra.mxu0 %v174
    %v202 = vpop.f32.mrf.mxu0
    %v203 = vadd.f32 %v165, %v202
    %204 = vmatmul.f32.gmra.mxu0 %v177
    %v205 = vpop.f32.mrf.mxu0
    %v206 = vadd.f32 %v165, %v205
    %207 = vdwg.mxu0
    %v208 = vld [vmem:[%s0] sm:$0xf]
    %v209 = vld [vmem:[%s0 + $0x4] sm:$0xf]
    %v210 = vld [vmem:[%s0 + $0x8] sm:$0xf]
    %v211 = vld [vmem:[%s0 + $0xc] sm:$0xf]
    %v212 = vld [vmem:[%s0 + $0x10] sm:$0xf]
    %v213 = vld [vmem:[%s0 + $0x14] sm:$0xf]
    %v214 = vld [vmem:[%s0 + $0x18] sm:$0xf]
    %v215 = vld [vmem:[%s0 + $0x1c] sm:$0xf]
    %v216 = vld [vmem:[%s0 + $0x20] sm:$0xf]
    %v217 = vld [vmem:[%s0 + $0x24] sm:$0xf]
    %v218 = vld [vmem:[%s0 + $0x28] sm:$0xf]
    %v219 = vld [vmem:[%s0 + $0x2c] sm:$0xf]
    %v220 = vld [vmem:[%s0 + $0x30] sm:$0xf]
    %v221 = vld [vmem:[%s0 + $0x34] sm:$0xf]
    %v222 = vld [vmem:[%s0 + $0x38] sm:$0xf]
    %v223 = vld [vmem:[%s0 + $0x3c] sm:$0xf]
    %v224 = vld [vmem:[%s0 + $0x40] sm:$0xf]
    %v225 = vld [vmem:[%s0 + $0x44] sm:$0xf]
    %v226 = vld [vmem:[%s0 + $0x48] sm:$0xf]
    %v227 = vld [vmem:[%s0 + $0x4c] sm:$0xf]
    %v228 = vld [vmem:[%s0 + $0x50] sm:$0xf]
    %v229 = vld [vmem:[%s0 + $0x54] sm:$0xf]
    %v230 = vld [vmem:[%s0 + $0x58] sm:$0xf]
    %v231 = vld [vmem:[%s0 + $0x5c] sm:$0xf]
    %v232 = vld [vmem:[%s0 + $0x60] sm:$0xf]
    %v233 = vld [vmem:[%s0 + $0x64] sm:$0xf]
    %v234 = vld [vmem:[%s0 + $0x68] sm:$0xf]
    %v235 = vld [vmem:[%s0 + $0x6c] sm:$0xf]
    %v236 = vld [vmem:[%s0 + $0x70] sm:$0xf]
    %v237 = vld [vmem:[%s0 + $0x74] sm:$0xf]
    %v238 = vld [vmem:[%s0 + $0x78] sm:$0xf]
    %v239 = vld [vmem:[%s0 + $0x7c] sm:$0xf]
    %v272 = vunpack.c.l.b16 %v208
    %v273 = vunpack.c.l.b16 %v209
    %v274 = vunpack.c.l.b16 %v210
    %v275 = vunpack.c.l.b16 %v211
    %v276 = vunpack.c.l.b16 %v212
    %v277 = vunpack.c.l.b16 %v213
    %v278 = vunpack.c.l.b16 %v214
    %v279 = vunpack.c.l.b16 %v215
    %v280 = vunpack.c.l.b16 %v216
    %v281 = vunpack.c.l.b16 %v217
    %v282 = vunpack.c.l.b16 %v218
    %v283 = vunpack.c.l.b16 %v219
    %v284 = vunpack.c.l.b16 %v220
    %v285 = vunpack.c.l.b16 %v221
    %v286 = vunpack.c.l.b16 %v222
    %v287 = vunpack.c.l.b16 %v223
    %v288 = vunpack.c.l.b16 %v224
    %v289 = vunpack.c.l.b16 %v225
    %v290 = vunpack.c.l.b16 %v226
    %v291 = vunpack.c.l.b16 %v227
    %v292 = vunpack.c.l.b16 %v228
    %v293 = vunpack.c.l.b16 %v229
    %v294 = vunpack.c.l.b16 %v230
    %v295 = vunpack.c.l.b16 %v231
    %v296 = vunpack.c.l.b16 %v232
    %v297 = vunpack.c.l.b16 %v233
    %v298 = vunpack.c.l.b16 %v234
    %v299 = vunpack.c.l.b16 %v235
    %v300 = vunpack.c.l.b16 %v236
    %v301 = vunpack.c.l.b16 %v237
    %v302 = vunpack.c.l.b16 %v238
    %v303 = vunpack.c.l.b16 %v239
    %v304 = vpack.c.b16 %v273, %v272
    %v305 = vpack.c.b16 %v275, %v274
    %v306 = vpack.c.b16 %v277, %v276
    %v307 = vpack.c.b16 %v279, %v278
    %v308 = vpack.c.b16 %v281, %v280
    %v309 = vpack.c.b16 %v283, %v282
    %v310 = vpack.c.b16 %v285, %v284
    %v311 = vpack.c.b16 %v287, %v286
    %v312 = vpack.c.b16 %v289, %v288
    %v313 = vpack.c.b16 %v291, %v290
    %v314 = vpack.c.b16 %v293, %v292
    %v315 = vpack.c.b16 %v295, %v294
    %v316 = vpack.c.b16 %v297, %v296
    %v317 = vpack.c.b16 %v299, %v298
    %v318 = vpack.c.b16 %v301, %v300
    %v319 = vpack.c.b16 %v303, %v302
    %v321 = vsel %vm111, %v304, 0
    %v324 = vsel %vm111, %v305, 0
    %v327 = vsel %vm111, %v306, 0
    %v330 = vsel %vm111, %v307, 0
    %v333 = vsel %vm111, %v308, 0
    %v336 = vsel %vm111, %v309, 0
    %v339 = vsel %vm111, %v310, 0
    %v342 = vsel %vm111, %v311, 0
    %v345 = vsel %vm111, %v312, 0
    %v348 = vsel %vm111, %v313, 0
    %v351 = vsel %vm111, %v314, 0
    %v354 = vsel %vm111, %v315, 0
    %v357 = vsel %vm111, %v316, 0
    %v360 = vsel %vm111, %v317, 0
    %v363 = vsel %vm111, %v318, 0
    %v366 = vsel %vm111, %v319, 0
    %368 = vmatpush.bf16.msra.mxu0 0
    %369 = vmatpush.bf16.msra.mxu0 0
    %370 = vmatpush.bf16.msra.mxu0 0
    %371 = vmatpush.bf16.msra.mxu0 0
    %372 = vmatpush.bf16.msra.mxu0 0
    %373 = vmatpush.bf16.msra.mxu0 0
    %374 = vmatpush.bf16.msra.mxu0 %v154
    %375 = vmatpush.bf16.msra.mxu0 %v153
    %376 = vmatmul.bf16.gmra.mxu0 %v321
    %v377 = vpop.f32.mrf.mxu0
    %v378 = vadd.f32 0.0, %v377
    %v379 = vpop.f32.mrf.mxu0
    %v380 = vadd.f32 0.0, %v379
    %381 = vmatmul.bf16.gmra.mxu0 %v324
    %v382 = vpop.f32.mrf.mxu0
    %v383 = vadd.f32 0.0, %v382
    %v384 = vpop.f32.mrf.mxu0
    %v385 = vadd.f32 0.0, %v384
    %386 = vmatmul.bf16.gmra.mxu0 %v327
    %v387 = vpop.f32.mrf.mxu0
    %v388 = vadd.f32 0.0, %v387
    %v389 = vpop.f32.mrf.mxu0
    %v390 = vadd.f32 0.0, %v389
    %391 = vmatmul.bf16.gmra.mxu0 %v330
    %v392 = vpop.f32.mrf.mxu0
    %v393 = vadd.f32 0.0, %v392
    %v394 = vpop.f32.mrf.mxu0
    %v395 = vadd.f32 0.0, %v394
    %396 = vmatmul.bf16.gmra.mxu0 %v333
    %v397 = vpop.f32.mrf.mxu0
    %v398 = vadd.f32 0.0, %v397
    %v399 = vpop.f32.mrf.mxu0
    %v400 = vadd.f32 0.0, %v399
    %401 = vmatmul.bf16.gmra.mxu0 %v336
    %v402 = vpop.f32.mrf.mxu0
    %v403 = vadd.f32 0.0, %v402
    %v404 = vpop.f32.mrf.mxu0
    %v405 = vadd.f32 0.0, %v404
    %406 = vmatmul.bf16.gmra.mxu0 %v339
    %v407 = vpop.f32.mrf.mxu0
    %v408 = vadd.f32 0.0, %v407
    %v409 = vpop.f32.mrf.mxu0
    %v410 = vadd.f32 0.0, %v409
    %411 = vmatmul.bf16.gmra.mxu0 %v342
    %v412 = vpop.f32.mrf.mxu0
    %v413 = vadd.f32 0.0, %v412
    %v414 = vpop.f32.mrf.mxu0
    %v415 = vadd.f32 0.0, %v414
    %416 = vmatmul.bf16.gmra.mxu0 %v345
    %v417 = vpop.f32.mrf.mxu0
    %v418 = vadd.f32 0.0, %v417
    %v419 = vpop.f32.mrf.mxu0
    %v420 = vadd.f32 0.0, %v419
    %421 = vmatmul.bf16.gmra.mxu0 %v348
    %v422 = vpop.f32.mrf.mxu0
    %v423 = vadd.f32 0.0, %v422
    %v424 = vpop.f32.mrf.mxu0
    %v425 = vadd.f32 0.0, %v424
    %426 = vmatmul.bf16.gmra.mxu0 %v351
    %v427 = vpop.f32.mrf.mxu0
    %v428 = vadd.f32 0.0, %v427
    %v429 = vpop.f32.mrf.mxu0
    %v430 = vadd.f32 0.0, %v429
    %431 = vmatmul.bf16.gmra.mxu0 %v354
    %v432 = vpop.f32.mrf.mxu0
    %v433 = vadd.f32 0.0, %v432
    %v434 = vpop.f32.mrf.mxu0
    %v435 = vadd.f32 0.0, %v434
    %436 = vmatmul.bf16.gmra.mxu0 %v357
    %v437 = vpop.f32.mrf.mxu0
    %v438 = vadd.f32 0.0, %v437
    %v439 = vpop.f32.mrf.mxu0
    %v440 = vadd.f32 0.0, %v439
    %441 = vmatmul.bf16.gmra.mxu0 %v360
    %v442 = vpop.f32.mrf.mxu0
    %v443 = vadd.f32 0.0, %v442
    %v444 = vpop.f32.mrf.mxu0
    %v445 = vadd.f32 0.0, %v444
    %446 = vmatmul.bf16.gmra.mxu0 %v363
    %v447 = vpop.f32.mrf.mxu0
    %v448 = vadd.f32 0.0, %v447
    %v449 = vpop.f32.mrf.mxu0
    %v450 = vadd.f32 0.0, %v449
    %451 = vmatmul.bf16.gmra.mxu0 %v366
    %v452 = vpop.f32.mrf.mxu0
    %v453 = vadd.f32 0.0, %v452
    %v454 = vpop.f32.mrf.mxu0
    %v455 = vadd.f32 0.0, %v454
    %456 = vdwg.mxu0
    %v457 = vadd.f32 %v378, %v197
    %v458 = vadd.f32 %v380, %v200
    %v459 = vadd.f32 %v383, %v203
    %v460 = vadd.f32 %v385, %v206
    %v461 = vadd.f32 %v388, %v197
    %v462 = vadd.f32 %v390, %v200
    %v463 = vadd.f32 %v393, %v203
    %v464 = vadd.f32 %v395, %v206
    %v465 = vadd.f32 %v398, %v197
    %v466 = vadd.f32 %v400, %v200
    %v467 = vadd.f32 %v403, %v203
    %v468 = vadd.f32 %v405, %v206
    %v469 = vadd.f32 %v408, %v197
    %v470 = vadd.f32 %v410, %v200
    %v471 = vadd.f32 %v413, %v203
    %v472 = vadd.f32 %v415, %v206
    %v473 = vadd.f32 %v418, %v197
    %v474 = vadd.f32 %v420, %v200
    %v475 = vadd.f32 %v423, %v203
    %v476 = vadd.f32 %v425, %v206
    %v477 = vadd.f32 %v428, %v197
    %v478 = vadd.f32 %v430, %v200
    %v479 = vadd.f32 %v433, %v203
    %v480 = vadd.f32 %v435, %v206
    %v481 = vadd.f32 %v438, %v197
    %v482 = vadd.f32 %v440, %v200
    %v483 = vadd.f32 %v443, %v203
    %v484 = vadd.f32 %v445, %v206
    %v485 = vadd.f32 %v448, %v197
    %v486 = vadd.f32 %v450, %v200
    %v487 = vadd.f32 %v453, %v203
    %v488 = vadd.f32 %v455, %v206
    %v489 = vadd.f32 %v457, %v461
    %v490 = vadd.f32 %v458, %v462
    %v491 = vadd.f32 %v459, %v463
    %v492 = vadd.f32 %v460, %v464
    %v493 = vmax.f32 %v457, %v461
    %v494 = vmax.f32 %v458, %v462
    %v495 = vmax.f32 %v459, %v463
    %v496 = vmax.f32 %v460, %v464
    %v497 = vmin.f32 %v457, %v461
    %v498 = vmin.f32 %v458, %v462
    %v499 = vmin.f32 %v459, %v463
    %v500 = vmin.f32 %v460, %v464
    %v501 = vadd.f32 %v489, %v465
    %v502 = vadd.f32 %v490, %v466
    %v503 = vadd.f32 %v491, %v467
    %v504 = vadd.f32 %v492, %v468
    %v505 = vmax.f32 %v493, %v465
    %v506 = vmax.f32 %v494, %v466
    %v507 = vmax.f32 %v495, %v467
    %v508 = vmax.f32 %v496, %v468
    %v509 = vmin.f32 %v497, %v465
    %v510 = vmin.f32 %v498, %v466
    %v511 = vmin.f32 %v499, %v467
    %v512 = vmin.f32 %v500, %v468
    %v513 = vadd.f32 %v501, %v469
    %v514 = vadd.f32 %v502, %v470
    %v515 = vadd.f32 %v503, %v471
    %v516 = vadd.f32 %v504, %v472
    %v517 = vmax.f32 %v505, %v469
    %v518 = vmax.f32 %v506, %v470
    %v519 = vmax.f32 %v507, %v471
    %v520 = vmax.f32 %v508, %v472
    %v521 = vmin.f32 %v509, %v469
    %v522 = vmin.f32 %v510, %v470
    %v523 = vmin.f32 %v511, %v471
    %v524 = vmin.f32 %v512, %v472
    %v525 = vadd.f32 %v513, %v473
    %v526 = vadd.f32 %v514, %v474
    %v527 = vadd.f32 %v515, %v475
    %v528 = vadd.f32 %v516, %v476
    %v529 = vmax.f32 %v517, %v473
    %v530 = vmax.f32 %v518, %v474
    %v531 = vmax.f32 %v519, %v475
    %v532 = vmax.f32 %v520, %v476
    %v533 = vmin.f32 %v521, %v473
    %v534 = vmin.f32 %v522, %v474
    %v535 = vmin.f32 %v523, %v475
    %v536 = vmin.f32 %v524, %v476
    %v537 = vadd.f32 %v525, %v477
    %v538 = vadd.f32 %v526, %v478
    %v539 = vadd.f32 %v527, %v479
    %v540 = vadd.f32 %v528, %v480
    %v541 = vmax.f32 %v529, %v477
    %v542 = vmax.f32 %v530, %v478
    %v543 = vmax.f32 %v531, %v479
    %v544 = vmax.f32 %v532, %v480
    %v545 = vmin.f32 %v533, %v477
    %v546 = vmin.f32 %v534, %v478
    %v547 = vmin.f32 %v535, %v479
    %v548 = vmin.f32 %v536, %v480
    %v549 = vadd.f32 %v537, %v481
    %v550 = vadd.f32 %v538, %v482
    %v551 = vadd.f32 %v539, %v483
    %v552 = vadd.f32 %v540, %v484
    %v553 = vmax.f32 %v541, %v481
    %v554 = vmax.f32 %v542, %v482
    %v555 = vmax.f32 %v543, %v483
    %v556 = vmax.f32 %v544, %v484
    %v557 = vmin.f32 %v545, %v481
    %v558 = vmin.f32 %v546, %v482
    %v559 = vmin.f32 %v547, %v483
    %v560 = vmin.f32 %v548, %v484
    %v561 = vadd.f32 %v549, %v485
    %v562 = vadd.f32 %v550, %v486
    %v563 = vadd.f32 %v551, %v487
    %v564 = vadd.f32 %v552, %v488
    %v565 = vmax.f32 %v553, %v485
    %v566 = vmax.f32 %v554, %v486
    %v567 = vmax.f32 %v555, %v487
    %v568 = vmax.f32 %v556, %v488
    %v569 = vmin.f32 %v557, %v485
    %v570 = vmin.f32 %v558, %v486
    %v571 = vmin.f32 %v559, %v487
    %v572 = vmin.f32 %v560, %v488
    %v573 = vmul.f32 %v561, 0.125
    %v574 = vmul.f32 %v562, 0.125
    %v575 = vmul.f32 %v563, 0.125
    %v576 = vmul.f32 %v564, 0.125
    %581 = vrot.lane.b32.xlu0 %v573, 32
    %v582 = vpop.permute.xlu0 %581
    %583 = vrot.lane.b32.xlu0 %v574, 32
    %v584 = vpop.permute.xlu0 %583
    %585 = vrot.lane.b32.xlu0 %v575, 32
    %v586 = vpop.permute.xlu0 %585
    %587 = vrot.lane.b32.xlu0 %v576, 32
    %v588 = vpop.permute.xlu0 %587
    %597 = vrot.lane.b32.xlu0 %v565, 64
    %v598 = vpop.permute.xlu0 %597
    %599 = vrot.lane.b32.xlu0 %v566, 64
    %v600 = vpop.permute.xlu0 %599
    %601 = vrot.lane.b32.xlu0 %v567, 64
    %v602 = vpop.permute.xlu0 %601
    %603 = vrot.lane.b32.xlu0 %v568, 64
    %v604 = vpop.permute.xlu0 %603
    %613 = vrot.lane.b32.xlu0 %v569, 96
    %v614 = vpop.permute.xlu0 %613
    %615 = vrot.lane.b32.xlu0 %v570, 96
    %v616 = vpop.permute.xlu0 %615
    %617 = vrot.lane.b32.xlu0 %v571, 96
    %v618 = vpop.permute.xlu0 %617
    %619 = vrot.lane.b32.xlu0 %v572, 96
    %v620 = vpop.permute.xlu0 %619
    %v625 = vsel %vm111, %v155, %v582
    %v626 = vsel %vm111, %v156, %v584
    %v627 = vsel %vm111, %v157, %v586
    %v628 = vsel %vm111, %v158, %v588
    %vm629 = vcmask 523264
    %v630 = vsel %vm629, %v625, %v598
    %v631 = vsel %vm629, %v626, %v600
    %v632 = vsel %vm629, %v627, %v602
    %v633 = vsel %vm629, %v628, %v604
    %vm634 = vcmask 785408
    %v635 = vsel %vm634, %v630, %v614
    %v636 = vsel %vm634, %v631, %v616
    %v637 = vsel %vm634, %v632, %v618
    %v638 = vsel %vm634, %v633, %v620
    %v639 = vld [vmem:[%s7] sm:$0xff]
    %v640 = vld [vmem:[%s7 + $0x8] sm:$0xff]
    %v641 = vld [vmem:[%s7 + $0x10] sm:$0xff]
    %v642 = vld [vmem:[%s7 + $0x18] sm:$0xff]
    %v643 = vld [vmem:[%s7 + $0x20] sm:$0xff]
    %v644 = vld [vmem:[%s7 + $0x28] sm:$0xff]
    %v645 = vld [vmem:[%s7 + $0x30] sm:$0xff]
    %v646 = vld [vmem:[%s7 + $0x38] sm:$0xff]
    %v647 = vld [vmem:[%s7 + $0x40] sm:$0xff]
    %v648 = vld [vmem:[%s7 + $0x48] sm:$0xff]
    %v649 = vld [vmem:[%s7 + $0x50] sm:$0xff]
    %v650 = vld [vmem:[%s7 + $0x58] sm:$0xff]
    %v651 = vld [vmem:[%s7 + $0x60] sm:$0xff]
    %v652 = vld [vmem:[%s7 + $0x68] sm:$0xff]
    %v653 = vld [vmem:[%s7 + $0x70] sm:$0xff]
    %v654 = vld [vmem:[%s7 + $0x78] sm:$0xff]
    %v655 = vld [vmem:[%s8] sm:$0x1]
    %v657 = vperm.slane %v655, 0
    %659 = vmatpush.msra.mxu0 %v654
    %660 = vmatpush.msra.mxu0 %v653
    %661 = vmatpush.msra.mxu0 %v652
    %662 = vmatpush.msra.mxu0 %v651
    %663 = vmatpush.msra.mxu0 %v650
    %664 = vmatpush.msra.mxu0 %v649
    %665 = vmatpush.msra.mxu0 %v648
    %666 = vmatpush.msra.mxu0 %v647
    %667 = vmatpush.msra.mxu0 %v646
    %668 = vmatpush.msra.mxu0 %v645
    %669 = vmatpush.msra.mxu0 %v644
    %670 = vmatpush.msra.mxu0 %v643
    %671 = vmatpush.msra.mxu0 %v642
    %672 = vmatpush.msra.mxu0 %v641
    %673 = vmatpush.msra.mxu0 %v640
    %674 = vmatpush.msra.mxu0 %v639
    %675 = vmatmul.f32.gmra.mxu0 %v635
    %v676 = vpop.f32.mrf.mxu0
    %v677 = vadd.f32 %v657, %v676
    %678 = vmatmul.f32.gmra.mxu0 %v636
    %v679 = vpop.f32.mrf.mxu0
    %v680 = vadd.f32 %v657, %v679
    %681 = vmatmul.f32.gmra.mxu0 %v637
    %v682 = vpop.f32.mrf.mxu0
    %v683 = vadd.f32 %v657, %v682
    %684 = vmatmul.f32.gmra.mxu0 %v638
    %v685 = vpop.f32.mrf.mxu0
    %v686 = vadd.f32 %v657, %v685
    %687 = vdwg.mxu0
    %v688 = vlaneseq
    %v689 = vand.u32 %v688, 127
    %vm690 = vcmp.lt.s32.totalorder %v689, 16
    %v691 = vld [vmem:[%s3] sm:$0xff]
    %v692 = vld [vmem:[%s3 + $0x8] sm:$0xff]
    %v693 = vld [vmem:[%s3 + $0x10] sm:$0xff]
    %v694 = vld [vmem:[%s3 + $0x18] sm:$0xff]
    %696 = vset.pattern.permute.xlu0 0
    %697 = vperm.xlu0 %696, %v691
    %v698 = vpop.permute.xlu0 %697
    %701 = vset.pattern.permute.xlu0 0
    %702 = vperm.xlu0 %701, %v692
    %v703 = vpop.permute.xlu0 %702
    %706 = vset.pattern.permute.xlu0 0
    %707 = vperm.xlu0 %706, %v693
    %v708 = vpop.permute.xlu0 %707
    %711 = vset.pattern.permute.xlu0 0
    %712 = vperm.xlu0 %711, %v694
    %v713 = vpop.permute.xlu0 %712
    %v715 = vsel %vm690, %v698, 1.0
    %v716 = vsel %vm690, %v703, 1.0
    %v717 = vsel %vm690, %v708, 1.0
    %v718 = vsel %vm690, %v713, 1.0
    %v719 = vmul.f32 %v677, %v715
    %v720 = vmul.f32 %v680, %v716
    %v721 = vmul.f32 %v683, %v717
    %v722 = vmul.f32 %v686, %v718
    %v723 = vld [vmem:[#allocation8] sm:$0xff]
    %v724 = vld [vmem:[#allocation8 + $0x8] sm:$0xff]
    %v725 = vld [vmem:[#allocation8 + $0x10] sm:$0xff]
    %v726 = vld [vmem:[#allocation8 + $0x18] sm:$0xff]
    %v727 = vld [vmem:[%s10] sm:$0x1]
    %v729 = vperm.slane %v727, 0
    %v732 = vsel %vm111, %v719, 0
    %v735 = vsel %vm111, %v720, 0
    %v738 = vsel %vm111, %v721, 0
    %v741 = vsel %vm111, %v722, 0
    %743 = vmatpush.msra.mxu0 0.0
    %744 = vmatpush.msra.mxu0 0.0
    %745 = vmatpush.msra.mxu0 0.0
    %746 = vmatpush.msra.mxu0 0.0
    %747 = vmatpush.msra.mxu0 0.0
    %748 = vmatpush.msra.mxu0 0.0
    %749 = vmatpush.msra.mxu0 0.0
    %750 = vmatpush.msra.mxu0 0.0
    %751 = vmatpush.msra.mxu0 0.0
    %752 = vmatpush.msra.mxu0 0.0
    %753 = vmatpush.msra.mxu0 0.0
    %754 = vmatpush.msra.mxu0 0.0
    %755 = vmatpush.msra.mxu0 %v726
    %756 = vmatpush.msra.mxu0 %v725
    %757 = vmatpush.msra.mxu0 %v724
    %758 = vmatpush.msra.mxu0 %v723
    %759 = vmatmul.f32.gmra.mxu0 %v732
    %v760 = vpop.f32.mrf.mxu0
    %v761 = vadd.f32 %v729, %v760
    %762 = vmatmul.f32.gmra.mxu0 %v735
    %v763 = vpop.f32.mrf.mxu0
    %v764 = vadd.f32 %v729, %v763
    %765 = vmatmul.f32.gmra.mxu0 %v738
    %v766 = vpop.f32.mrf.mxu0
    %v767 = vadd.f32 %v729, %v766
    %768 = vmatmul.f32.gmra.mxu0 %v741
    %v769 = vpop.f32.mrf.mxu0
    %v770 = vadd.f32 %v729, %v769
    %771 = vdwg.mxu0
    %vm772 = vcmp.ge.f32.partialorder %v761, 0.0
    %vm773 = vcmp.ge.f32.partialorder %v764, 0.0
    %vm774 = vcmp.ge.f32.partialorder %v767, 0.0
    %vm775 = vcmp.ge.f32.partialorder %v770, 0.0
    %v776 = vmul.f32 %v761, 0.01
    %v777 = vmul.f32 %v764, 0.01
    %v778 = vmul.f32 %v767, 0.01
    %v779 = vmul.f32 %v770, 0.01
    %v780 = vsel %vm772, %v761, %v776
    %v781 = vsel %vm773, %v764, %v777
    %v782 = vsel %vm774, %v767, %v778
    %v783 = vsel %vm775, %v770, %v779
    %v784 = vtanh.pop %v761
    %v785 = vtanh.pop %v764
    %v786 = vtanh.pop %v767
    %v787 = vtanh.pop %v770
    %v788 = vsel %vm690, %v780, %v784
    %v789 = vsel %vm690, %v781, %v785
    %v790 = vsel %vm690, %v782, %v786
    %v791 = vsel %vm690, %v783, %v787
    %792 = vst.msk [vmem:[#allocation10] sm:$0xff] %vm111, %v788
    %793 = vst.msk [vmem:[#allocation10 + $0x8] sm:$0xff] %vm111, %v789
    %794 = vst.msk [vmem:[#allocation10 + $0x10] sm:$0xff] %vm111, %v790
    %795 = vst.msk [vmem:[#allocation10 + $0x18] sm:$0xff] %vm111, %v791
    // Predicated region
    $region62: #{tpu_custom_call.1} parent=1 // pred_check
      _
    $region63: #{tpu_custom_call.1} parent=1 // pred_check_branch
      %797 = sbr.rel (0) target = $region65
    $region64: #{tpu_custom_call.1} parent=1 // pred_region
      %799 = vsyncadd [#allocation4], 0
      %s800 = sshll.u32 [#allocation10], 4
      %s801 = int_to_ptr.vmem [resolvable:$true] %s800
      %s802 = sshll.u32 %s11, 4
      %s803 = int_to_ptr.hbm [resolvable:$true] %s802
      %808 = dma.vmem_to_hbm [thread:$0]  %s801, 512, %s803, [#allocation4], 128, 128, 8
    $region65: #{tpu_custom_call.1} parent=1 // pred_fallthru
      _
    // Predicated region
    $region66: #{tpu_custom_call.1} parent=1 // pred_check
      _
    $region67: #{tpu_custom_call.1} parent=1 // pred_check_branch
      %810 = sbr.rel (0) target = $region69
    $region68: #{tpu_custom_call.1} parent=1 // pred_region
      %812 = dma.done [#allocation4], 512
    $region69: #{tpu_custom_call.1} parent=1 // pred_fallthru
      _
    %813 = vsyncpa [#allocation3], 1
    %814 = vsyncpa [#allocation6], 1
    %815 = vsyncpa [#allocation9], 1
    %816 = vsyncpa [#allocation4], 1

</llo_original>
